<compile_context>
chip_gen: v7x
topology: tpu7x:2x2x1
jax: 0.10.0
libtpu: 0.0.40
codegen_flags: <defaults>
</compile_context>

<pallas_src>
import functools

import jax
import jax.numpy as jnp
from jax.experimental import pallas as pl
from jax.experimental.pallas import tpu as pltpu


def _gen_loss_kernel(qh_ref, qhh_ref, phih_ref, phir_ref, fake_ref,
                     ph_ref, pr_ref, out_ref, *, batch, t_steps):
    # ---- Lrec = mse(Qh, Qh_hat) -------------------------------------------
    dq = qh_ref[...].astype(jnp.float32) - qhh_ref[...].astype(jnp.float32)
    lrec = jnp.sum(dq * dq) / float(dq.size)

    # ---- Lltc = mse(Phi_h, Phi_r) -----------------------------------------
    dphi = phih_ref[...].astype(jnp.float32) - phir_ref[...].astype(jnp.float32)
    lltc = jnp.sum(dphi * dphi) / float(dphi.size)

    # ---- Ladv = lsgan(Fake_pred, target=1.0) = mse(Fake_pred, 1.0) ---------
    # Target "ones" tensor is never materialized: subtract 1.0 in-register.
    df = fake_ref[...].astype(jnp.float32) - 1.0
    ladv = jnp.sum(df * df) / float(df.size)

    # ---- Lee = mse(Ph_ew, Pr_ew) + mse(Vh_ew, Vr_ew) ------------------------
    # Layout: (B*T, J*3), time on the sublane axis (free reshape in wrapper).
    dp = ph_ref[...].astype(jnp.float32) - pr_ref[...].astype(jnp.float32)
    rows, cols = dp.shape                          # rows == batch * t_steps
    lee_pos = jnp.sum(dp * dp) / float(rows * cols)

    # Vh - Vr == diff_t(Ph - Pr) == diff_t(dp).
    # roll by rows-1 along sublanes (XLU) -> rolled[r] = dp[r+1] (wraps).
    v = pltpu.roll(dp, rows - 1, axis=0) - dp
    # Drop each batch's last time-step row (including the global wrap row).
    # batch is a static Python int -> a handful of vector compares, no int div.
    row = jax.lax.broadcasted_iota(jnp.int32, dp.shape, 0)
    drop = row == (t_steps - 1)
    for b in range(1, batch):
        drop = drop | (row == ((b + 1) * t_steps - 1))
    v = jnp.where(drop, 0.0, v)
    lee = lee_pos + jnp.sum(v * v) / float(batch * (t_steps - 1) * cols)

    # ---- single packed output: [Ltotal, Lrec, Lltc, Lee, Ladv, 0, 0, 0] ----
    lane = jax.lax.broadcasted_iota(jnp.int32, out_ref.shape, 1)
    out_ref[...] = (jnp.where(lane == 0, ladv, 0.0)        # Ltotal = Ladv
                    + jnp.where(lane == 1, lrec, 0.0)
                    + jnp.where(lane == 2, lltc, 0.0)
                    + jnp.where(lane == 3, lee, 0.0)
                    + jnp.where(lane == 4, ladv, 0.0))


def generator_loss(Qh, Ph, Qh_hat, Qh_ew, Ph_ew, Jr, Qr_ew, Pr_ew,
                   Phi_h, Phi_r, Real_pred, Fake_pred):
    """Matches Generator_loss.forward argument order. Ph, Qh_ew, Jr, Qr_ew and
    Real_pred are accepted but unused, exactly like the PyTorch module."""
    del Ph, Qh_ew, Jr, Qr_ew, Real_pred

    # Only FREE contiguous reshapes in the wrapper — no concat/pad/ones/transpose.
    qh2 = Qh.reshape(Qh.shape[0], -1)                  # (B, T*J*3)
    qhh2 = Qh_hat.reshape(Qh_hat.shape[0], -1)
    phih2 = Phi_h.reshape(Phi_h.shape[0], -1)          # (B, H)
    phir2 = Phi_r.reshape(Phi_r.shape[0], -1)
    fake2 = Fake_pred.reshape(Fake_pred.shape[0], -1)  # (B, prod(patch))

    B, T = Ph_ew.shape[0], Ph_ew.shape[1]
    ph2 = Ph_ew.reshape(B * T, -1)                     # (B*T, J*3), time on sublanes
    pr2 = Pr_ew.reshape(B * T, -1)

    inputs = (qh2, qhh2, phih2, phir2, fake2, ph2, pr2)
    kernel = functools.partial(_gen_loss_kernel, batch=B, t_steps=T)

    total_elems = sum(int(x.size) for x in inputs)
    total_bytes = sum(int(x.size) * x.dtype.itemsize for x in inputs)
    cost = pl.CostEstimate(flops=4 * total_elems, transcendentals=0,
                           bytes_accessed=total_bytes + 32)

    vspec = pl.BlockSpec(memory_space=pltpu.MemorySpace.VMEM)
    call_kwargs = dict(
        out_shape=jax.ShapeDtypeStruct((1, 8), jnp.float32),
        in_specs=[vspec] * len(inputs),
        out_specs=vspec,
        cost_estimate=cost,
    )
    # Gridless whole-operand-resident design: raise the scoped VMEM limit only
    # if the footprint could approach v5e's 16 MiB default (never at demo size).
    vmem_need = 2 * total_bytes + (1 << 20)
    if vmem_need > (8 << 20):
        call_kwargs["compiler_params"] = pltpu.CompilerParams(
            vmem_limit_bytes=int(min(vmem_need, 96 << 20)))

    out = pl.pallas_call(kernel, **call_kwargs)(*inputs)

    ltotal = out[0, 0]
    lrec = out[0, 1]
    lltc = out[0, 2]
    lee = out[0, 3]
    ladv = out[0, 4]
    return ltotal, lrec, lltc, lee, ladv


def _reference(Qh, Qh_hat, Ph_ew, Pr_ew, Phi_h, Phi_r, Fake_pred):
    mse = lambda a, b: jnp.mean((a - b) ** 2)
    Vr = Pr_ew[:, 1:] - Pr_ew[:, :-1]
    Vh = Ph_ew[:, 1:] - Ph_ew[:, :-1]
    lrec = mse(Qh, Qh_hat)
    lltc = mse(Phi_h, Phi_r)
    lee = mse(Ph_ew, Pr_ew) + mse(Vh, Vr)
    ladv = jnp.mean((Fake_pred - 1.0) ** 2)
    return ladv, lrec, lltc, lee, ladv


if __name__ == "__main__":
    key = jax.random.PRNGKey(0)
    ks = jax.random.split(key, 12)

    B, T, J, C = 2, 8, 4, 3       # pose sequences: (batch, time, joints, xyz)
    H = 32                        # latent code size
    P = (1, 4, 4)                 # patch-discriminator output per sample

    Qh        = jax.random.normal(ks[0],  (B, T, J, C), jnp.float32)
    Ph        = jax.random.normal(ks[1],  (B, T, J, C), jnp.float32)
    Qh_hat    = jax.random.normal(ks[2],  (B, T, J, C), jnp.float32)
    Qh_ew     = jax.random.normal(ks[3],  (B, T, J, C), jnp.float32)
    Ph_ew     = jax.random.normal(ks[4],  (B, T, J, C), jnp.float32)
    Jr        = jax.random.normal(ks[5],  (B, T, J, C), jnp.float32)
    Qr_ew     = jax.random.normal(ks[6],  (B, T, J, C), jnp.float32)
    Pr_ew     = jax.random.normal(ks[7],  (B, T, J, C), jnp.float32)
    Phi_h     = jax.random.normal(ks[8],  (B, H), jnp.float32)
    Phi_r     = jax.random.normal(ks[9],  (B, H), jnp.float32)
    Real_pred = jax.random.normal(ks[10], (B,) + P, jnp.float32)
    Fake_pred = jax.random.normal(ks[11], (B,) + P, jnp.float32)

    out = generator_loss(Qh, Ph, Qh_hat, Qh_ew, Ph_ew, Jr, Qr_ew, Pr_ew,
                         Phi_h, Phi_r, Real_pred, Fake_pred)
    out = jax.block_until_ready(out)

    ref = _reference(Qh, Qh_hat, Ph_ew, Pr_ew, Phi_h, Phi_r, Fake_pred)
    for got, want in zip(out, ref):
        assert jnp.allclose(got, want, rtol=1e-5, atol=1e-5), (got, want)

    print("KERNEL_OK")
</pallas_src>

<mosaic_0001>
module attributes {stable_mosaic.version = 11 : i64} {
  func.func @_gen_loss_kernel(%arg0: memref<2x96xf32, #tpu.memory_space<vmem>>, %arg1: memref<2x96xf32, #tpu.memory_space<vmem>>, %arg2: memref<2x32xf32, #tpu.memory_space<vmem>>, %arg3: memref<2x32xf32, #tpu.memory_space<vmem>>, %arg4: memref<2x16xf32, #tpu.memory_space<vmem>>, %arg5: memref<16x12xf32, #tpu.memory_space<vmem>>, %arg6: memref<16x12xf32, #tpu.memory_space<vmem>>, %arg7: memref<1x8xf32, #tpu.memory_space<vmem>>) attributes {dimension_semantics = [], scalar_prefetch = 0 : i64, scratch_operands = 0 : i64, tpu.core_type = #tpu.core_type<tc>} {
    %c0 = arith.constant 0 : index
    %c0_0 = arith.constant 0 : index
    %0 = vector.load %arg0[%c0, %c0_0] : memref<2x96xf32, #tpu.memory_space<vmem>>, vector<2x96xf32>
    %c0_1 = arith.constant 0 : index
    %c0_2 = arith.constant 0 : index
    %1 = vector.load %arg1[%c0_1, %c0_2] : memref<2x96xf32, #tpu.memory_space<vmem>>, vector<2x96xf32>
    %2 = arith.subf %0, %1 : vector<2x96xf32>
    %3 = arith.mulf %2, %2 : vector<2x96xf32>
    %4 = vector.shape_cast %3 : vector<2x96xf32> to vector<1x2x96xf32>
    %cst = arith.constant dense<0.000000e+00> : vector<1xf32>
    %5 = vector.multi_reduction <add>, %4, %cst [1, 2] : vector<1x2x96xf32> to vector<1xf32>
    %6 = vector.shape_cast %5 : vector<1xf32> to vector<1x1x1xf32>
    %7 = vector.extract %6[0, 0, 0] : f32 from vector<1x1x1xf32>
    %cst_3 = arith.constant 1.920000e+02 : f32
    %8 = arith.divf %7, %cst_3 : f32
    %c0_4 = arith.constant 0 : index
    %c0_5 = arith.constant 0 : index
    %9 = vector.load %arg2[%c0_4, %c0_5] : memref<2x32xf32, #tpu.memory_space<vmem>>, vector<2x32xf32>
    %c0_6 = arith.constant 0 : index
    %c0_7 = arith.constant 0 : index
    %10 = vector.load %arg3[%c0_6, %c0_7] : memref<2x32xf32, #tpu.memory_space<vmem>>, vector<2x32xf32>
    %11 = arith.subf %9, %10 : vector<2x32xf32>
    %12 = arith.mulf %11, %11 : vector<2x32xf32>
    %13 = vector.shape_cast %12 : vector<2x32xf32> to vector<1x2x32xf32>
    %cst_8 = arith.constant dense<0.000000e+00> : vector<1xf32>
    %14 = vector.multi_reduction <add>, %13, %cst_8 [1, 2] : vector<1x2x32xf32> to vector<1xf32>
    %15 = vector.shape_cast %14 : vector<1xf32> to vector<1x1x1xf32>
    %16 = vector.extract %15[0, 0, 0] : f32 from vector<1x1x1xf32>
    %cst_9 = arith.constant 6.400000e+01 : f32
    %17 = arith.divf %16, %cst_9 : f32
    %c0_10 = arith.constant 0 : index
    %c0_11 = arith.constant 0 : index
    %18 = vector.load %arg4[%c0_10, %c0_11] : memref<2x16xf32, #tpu.memory_space<vmem>>, vector<2x16xf32>
    %cst_12 = arith.constant 1.000000e+00 : f32
    %19 = vector.broadcast %cst_12 : f32 to vector<2x16xf32>
    %20 = arith.subf %18, %19 : vector<2x16xf32>
    %21 = arith.mulf %20, %20 : vector<2x16xf32>
    %22 = vector.shape_cast %21 : vector<2x16xf32> to vector<1x2x16xf32>
    %cst_13 = arith.constant dense<0.000000e+00> : vector<1xf32>
    %23 = vector.multi_reduction <add>, %22, %cst_13 [1, 2] : vector<1x2x16xf32> to vector<1xf32>
    %24 = vector.shape_cast %23 : vector<1xf32> to vector<1x1x1xf32>
    %25 = vector.extract %24[0, 0, 0] : f32 from vector<1x1x1xf32>
    %cst_14 = arith.constant 3.200000e+01 : f32
    %26 = arith.divf %25, %cst_14 : f32
    %c0_15 = arith.constant 0 : index
    %c0_16 = arith.constant 0 : index
    %27 = vector.load %arg5[%c0_15, %c0_16] : memref<16x12xf32, #tpu.memory_space<vmem>>, vector<16x12xf32>
    %c0_17 = arith.constant 0 : index
    %c0_18 = arith.constant 0 : index
    %28 = vector.load %arg6[%c0_17, %c0_18] : memref<16x12xf32, #tpu.memory_space<vmem>>, vector<16x12xf32>
    %29 = arith.subf %27, %28 : vector<16x12xf32>
    %30 = arith.mulf %29, %29 : vector<16x12xf32>
    %31 = vector.shape_cast %30 : vector<16x12xf32> to vector<1x16x12xf32>
    %cst_19 = arith.constant dense<0.000000e+00> : vector<1xf32>
    %32 = vector.multi_reduction <add>, %31, %cst_19 [1, 2] : vector<1x16x12xf32> to vector<1xf32>
    %33 = vector.shape_cast %32 : vector<1xf32> to vector<1x1x1xf32>
    %34 = vector.extract %33[0, 0, 0] : f32 from vector<1x1x1xf32>
    %cst_20 = arith.constant 1.920000e+02 : f32
    %35 = arith.divf %34, %cst_20 : f32
    %c15_i32 = arith.constant 15 : i32
    %36 = tpu.dynamic_rotate %29 by %c15_i32 dim 0 : vector<16x12xf32>, i32 -> vector<16x12xf32>
    %37 = arith.subf %36, %29 : vector<16x12xf32>
    %38 = tpu.iota {dimensions = array<i32: 0>} : vector<16x12xi32>
    %c7_i32 = arith.constant 7 : i32
    %39 = vector.broadcast %c7_i32 : i32 to vector<16x12xi32>
    %40 = arith.cmpi eq, %38, %39 : vector<16x12xi32>
    %c15_i32_21 = arith.constant 15 : i32
    %41 = vector.broadcast %c15_i32_21 : i32 to vector<16x12xi32>
    %42 = arith.cmpi eq, %38, %41 : vector<16x12xi32>
    %43 = arith.ori %40, %42 : vector<16x12xi1>
    %cst_22 = arith.constant 0.000000e+00 : f32
    %44 = vector.broadcast %cst_22 : f32 to vector<16x12xf32>
    %45 = arith.select %43, %44, %37 : vector<16x12xi1>, vector<16x12xf32>
    %46 = arith.mulf %45, %45 : vector<16x12xf32>
    %47 = vector.shape_cast %46 : vector<16x12xf32> to vector<1x16x12xf32>
    %cst_23 = arith.constant dense<0.000000e+00> : vector<1xf32>
    %48 = vector.multi_reduction <add>, %47, %cst_23 [1, 2] : vector<1x16x12xf32> to vector<1xf32>
    %49 = vector.shape_cast %48 : vector<1xf32> to vector<1x1x1xf32>
    %50 = vector.extract %49[0, 0, 0] : f32 from vector<1x1x1xf32>
    %cst_24 = arith.constant 1.680000e+02 : f32
    %51 = arith.divf %50, %cst_24 : f32
    %52 = arith.addf %35, %51 : f32
    %53 = tpu.iota {dimensions = array<i32: 1>} : vector<1x8xi32>
    %c0_i32 = arith.constant 0 : i32
    %54 = vector.broadcast %c0_i32 : i32 to vector<1x8xi32>
    %55 = arith.cmpi eq, %53, %54 : vector<1x8xi32>
    %cst_25 = arith.constant 0.000000e+00 : f32
    %56 = vector.broadcast %26 : f32 to vector<1x8xf32>
    %57 = vector.broadcast %cst_25 : f32 to vector<1x8xf32>
    %58 = arith.select %55, %56, %57 : vector<1x8xi1>, vector<1x8xf32>
    %c1_i32 = arith.constant 1 : i32
    %59 = vector.broadcast %c1_i32 : i32 to vector<1x8xi32>
    %60 = arith.cmpi eq, %53, %59 : vector<1x8xi32>
    %cst_26 = arith.constant 0.000000e+00 : f32
    %61 = vector.broadcast %8 : f32 to vector<1x8xf32>
    %62 = vector.broadcast %cst_26 : f32 to vector<1x8xf32>
    %63 = arith.select %60, %61, %62 : vector<1x8xi1>, vector<1x8xf32>
    %64 = arith.addf %58, %63 : vector<1x8xf32>
    %c2_i32 = arith.constant 2 : i32
    %65 = vector.broadcast %c2_i32 : i32 to vector<1x8xi32>
    %66 = arith.cmpi eq, %53, %65 : vector<1x8xi32>
    %cst_27 = arith.constant 0.000000e+00 : f32
    %67 = vector.broadcast %17 : f32 to vector<1x8xf32>
    %68 = vector.broadcast %cst_27 : f32 to vector<1x8xf32>
    %69 = arith.select %66, %67, %68 : vector<1x8xi1>, vector<1x8xf32>
    %70 = arith.addf %64, %69 : vector<1x8xf32>
    %c3_i32 = arith.constant 3 : i32
    %71 = vector.broadcast %c3_i32 : i32 to vector<1x8xi32>
    %72 = arith.cmpi eq, %53, %71 : vector<1x8xi32>
    %cst_28 = arith.constant 0.000000e+00 : f32
    %73 = vector.broadcast %52 : f32 to vector<1x8xf32>
    %74 = vector.broadcast %cst_28 : f32 to vector<1x8xf32>
    %75 = arith.select %72, %73, %74 : vector<1x8xi1>, vector<1x8xf32>
    %76 = arith.addf %70, %75 : vector<1x8xf32>
    %c4_i32 = arith.constant 4 : i32
    %77 = vector.broadcast %c4_i32 : i32 to vector<1x8xi32>
    %78 = arith.cmpi eq, %53, %77 : vector<1x8xi32>
    %cst_29 = arith.constant 0.000000e+00 : f32
    %79 = vector.broadcast %26 : f32 to vector<1x8xf32>
    %80 = vector.broadcast %cst_29 : f32 to vector<1x8xf32>
    %81 = arith.select %78, %79, %80 : vector<1x8xi1>, vector<1x8xf32>
    %82 = arith.addf %76, %81 : vector<1x8xf32>
    %c0_30 = arith.constant 0 : index
    %c0_31 = arith.constant 0 : index
    %83 = vector.load %arg7[%c0_30, %c0_31] : memref<1x8xf32, #tpu.memory_space<vmem>>, vector<1x8xf32>
    tpu.vector_store %arg7[%c0_30, %c0_31], %82 {strides = array<i32>} : memref<1x8xf32, #tpu.memory_space<vmem>>, vector<1x8xf32>,
    return
  }
}

</mosaic_0001>

<llo_original>
// kernel: tpu_custom_call.1
$region0: #{tpu_custom_call.1}
  #allocation0 [shape = 'u32[]', space=smem, size = 0x4, offset = 0x4, fixed_abs, tag = 'smem constant byte address 0x4 - core index']
  #allocation1 [shape = 'u32[144,128]{1,0:T(1,128)}', space=vmem, size = 0x12000, scoped, tag = 'internal scratch']
  %s0 = inlined_call_operand.hbm [shape: f32[2,96], index: 0, kind: input, shape index: {}]
  %s1 = inlined_call_operand.vmem [shape: f32[2,96], index: 1, kind: input, shape index: {}]
  %s2 = inlined_call_operand.hbm [shape: f32[2,32], index: 2, kind: input, shape index: {}]
  %s3 = inlined_call_operand.hbm [shape: f32[2,32], index: 3, kind: input, shape index: {}]
  %s4 = inlined_call_operand.hbm [shape: f32[2,16], index: 4, kind: input, shape index: {}]
  %s5 = inlined_call_operand.vmem [shape: f32[16,12], index: 5, kind: input, shape index: {}]
  %s6 = inlined_call_operand.hbm [shape: f32[16,12], index: 6, kind: input, shape index: {}]
  %s7 = inlined_call_operand.hbm [shape: f32[1,8], index: 7, kind: output, shape index: {}]
  %s8 = sld [smem:[#allocation0]]
  $region58: #{tpu_custom_call.1} parent=0
    _
  %s10 = ssub.s32 1, %s8
  %s11 = scalar_select 0, %s10, %s8
  $region1: #{tpu_custom_call.1} parent=0
    #allocation2 [shape = 'u8[1024]{0}', space=vmem, size = 0x400, scoped, tag = 'input window, operand 0, single buffered']
    #allocation3 [shape = 's32[1]{0}', space=sflag, size = 0x4, scoped, tag = 'scoped memory for tpu_custom_call.1']
    #allocation4 [shape = 's32[1]{0}', space=sflag, size = 0x4, scoped, tag = 'scoped memory for tpu_custom_call.1']
    #allocation5 [shape = 'u8[1024]{0}', space=vmem, size = 0x400, scoped, tag = 'input window, operand 2, single buffered']
    #allocation6 [shape = 's32[1]{0}', space=sflag, size = 0x4, scoped, tag = 'scoped memory for tpu_custom_call.1']
    #allocation7 [shape = 'u8[1024]{0}', space=vmem, size = 0x400, scoped, tag = 'input window, operand 3, single buffered']
    #allocation8 [shape = 'u8[1024]{0}', space=vmem, size = 0x400, scoped, tag = 'input window, operand 4, single buffered']
    #allocation9 [shape = 's32[1]{0}', space=sflag, size = 0x4, scoped, tag = 'scoped memory for tpu_custom_call.1']
    #allocation10 [shape = 'u8[8192]{0}', space=vmem, size = 0x2000, scoped, tag = 'input window, operand 6, single buffered']
    #allocation11 [shape = 'u8[512]{0}', space=vmem, size = 0x400, scoped, tag = 'output window, operand 0, single buffered']
    %12 = vsyncpa [#allocation3], 0
    %13 = vsyncpa [#allocation6], 0
    %14 = vsyncpa [#allocation9], 0
    %15 = vsyncpa [#allocation4], 0
    // Predicated region
    $region2: #{tpu_custom_call.1} parent=1 // pred_check
      _
    $region3: #{tpu_custom_call.1} parent=1 // pred_check_branch
      %17 = sbr.rel (0) target = $region5
    $region4: #{tpu_custom_call.1} parent=1 // pred_region
      %s19 = ssub.s32 32, 32
      %20 = vsyncadd [#allocation3], %s19
      %s22 = sshll.u32 [#allocation2], 4
      %s23 = int_to_ptr.vmem [resolvable:$true] %s22
      %25 = dma.hbm_to_vmem [thread:$0]  %s0, 32, %s23, [#allocation3]
    $region5: #{tpu_custom_call.1} parent=1 // pred_fallthru
      _
    // Predicated region
    $region6: #{tpu_custom_call.1} parent=1 // pred_check
      _
    $region7: #{tpu_custom_call.1} parent=1 // pred_check_branch
      %27 = sbr.rel (0) target = $region9
    $region8: #{tpu_custom_call.1} parent=1 // pred_region
      _
    $region9: #{tpu_custom_call.1} parent=1 // pred_fallthru
      _
    // Predicated region
    $region10: #{tpu_custom_call.1} parent=1 // pred_check
      _
    $region11: #{tpu_custom_call.1} parent=1 // pred_check_branch
      %29 = sbr.rel (0) target = $region13
    $region12: #{tpu_custom_call.1} parent=1 // pred_region
      %s31 = ssub.s32 32, 32
      %32 = vsyncadd [#allocation6], %s31
      %s34 = sshll.u32 [#allocation5], 4
      %s35 = int_to_ptr.vmem [resolvable:$true] %s34
      %37 = dma.hbm_to_vmem [thread:$0]  %s2, 32, %s35, [#allocation6]
    $region13: #{tpu_custom_call.1} parent=1 // pred_fallthru
      _
    // Predicated region
    $region14: #{tpu_custom_call.1} parent=1 // pred_check
      _
    $region15: #{tpu_custom_call.1} parent=1 // pred_check_branch
      %39 = sbr.rel (0) target = $region17
    $region16: #{tpu_custom_call.1} parent=1 // pred_region
      %s41 = ssub.s32 32, 32
      %42 = vsyncadd [#allocation6], %s41
      %s44 = sshll.u32 [#allocation7], 4
      %s45 = int_to_ptr.vmem [resolvable:$true] %s44
      %47 = dma.hbm_to_vmem [thread:$0]  %s3, 32, %s45, [#allocation6]
    $region17: #{tpu_custom_call.1} parent=1 // pred_fallthru
      _
    // Predicated region
    $region18: #{tpu_custom_call.1} parent=1 // pred_check
      _
    $region19: #{tpu_custom_call.1} parent=1 // pred_check_branch
      %49 = sbr.rel (0) target = $region21
    $region20: #{tpu_custom_call.1} parent=1 // pred_region
      %s51 = ssub.s32 32, 32
      %52 = vsyncadd [#allocation9], %s51
      %s54 = sshll.u32 [#allocation8], 4
      %s55 = int_to_ptr.vmem [resolvable:$true] %s54
      %57 = dma.hbm_to_vmem [thread:$0]  %s4, 32, %s55, [#allocation9]
    $region21: #{tpu_custom_call.1} parent=1 // pred_fallthru
      _
    // Predicated region
    $region22: #{tpu_custom_call.1} parent=1 // pred_check
      _
    $region23: #{tpu_custom_call.1} parent=1 // pred_check_branch
      %59 = sbr.rel (0) target = $region25
    $region24: #{tpu_custom_call.1} parent=1 // pred_region
      _
    $region25: #{tpu_custom_call.1} parent=1 // pred_fallthru
      _
    // Predicated region
    $region26: #{tpu_custom_call.1} parent=1 // pred_check
      _
    $region27: #{tpu_custom_call.1} parent=1 // pred_check_branch
      %61 = sbr.rel (0) target = $region29
    $region28: #{tpu_custom_call.1} parent=1 // pred_region
      %s63 = ssub.s32 256, 256
      %64 = vsyncadd [#allocation9], %s63
      %s65 = sshll.u32 [#allocation10], 4
      %s66 = int_to_ptr.vmem [resolvable:$true] %s65
      %71 = dma.hbm_to_vmem [thread:$0]  %s6, 256, %s66, [#allocation9], 128, 128, 8
    $region29: #{tpu_custom_call.1} parent=1 // pred_fallthru
      _
    // Predicated region
    $region30: #{tpu_custom_call.1} parent=1 // pred_check
      _
    $region31: #{tpu_custom_call.1} parent=1 // pred_check_branch
      %73 = sbr.rel (0) target = $region33
    $region32: #{tpu_custom_call.1} parent=1 // pred_region
      %74 = dma.done [#allocation3], 32
    $region33: #{tpu_custom_call.1} parent=1 // pred_fallthru
      _
    // Predicated region
    $region34: #{tpu_custom_call.1} parent=1 // pred_check
      _
    $region35: #{tpu_custom_call.1} parent=1 // pred_check_branch
      %76 = sbr.rel (0) target = $region37
    $region36: #{tpu_custom_call.1} parent=1 // pred_region
      %77 = dma.done [#allocation6], 32
    $region37: #{tpu_custom_call.1} parent=1 // pred_fallthru
      _
    // Predicated region
    $region38: #{tpu_custom_call.1} parent=1 // pred_check
      _
    $region39: #{tpu_custom_call.1} parent=1 // pred_check_branch
      %79 = sbr.rel (0) target = $region41
    $region40: #{tpu_custom_call.1} parent=1 // pred_region
      %80 = dma.done [#allocation6], 32
    $region41: #{tpu_custom_call.1} parent=1 // pred_fallthru
      _
    // Predicated region
    $region42: #{tpu_custom_call.1} parent=1 // pred_check
      _
    $region43: #{tpu_custom_call.1} parent=1 // pred_check_branch
      %82 = sbr.rel (0) target = $region45
    $region44: #{tpu_custom_call.1} parent=1 // pred_region
      %83 = dma.done [#allocation9], 32
    $region45: #{tpu_custom_call.1} parent=1 // pred_fallthru
      _
    // Predicated region
    $region46: #{tpu_custom_call.1} parent=1 // pred_check
      _
    $region47: #{tpu_custom_call.1} parent=1 // pred_check_branch
      %85 = sbr.rel (0) target = $region49
    $region48: #{tpu_custom_call.1} parent=1 // pred_region
      %86 = dma.done [#allocation9], 256
    $region49: #{tpu_custom_call.1} parent=1 // pred_fallthru
      _
    %v87 = vld [vmem:[#allocation2] sm:$0x3]
    %v88 = vld [vmem:[%s1] sm:$0x3]
    %v89 = vsub.f32 %v87, %v88
    %v90 = vmul.f32 %v89, %v89
    %vm91 = vcmask 779264
    %v92 = vsel %vm91, %v90, 0.0
    %93 = vadd.xlane.f32.xlu0 %v92
    %v94 = vpop.xlane.xlu0 %93
    %v95 = vrot.slane %v94, 4
    %v96 = vadd.f32 %v94, %v95
    %v97 = vrot.slane %v96, 2
    %v98 = vadd.f32 %v96, %v97
    %v99 = vrot.slane %v98, 1
    %v100 = vadd.f32 %v98, %v99
    %s101 = vtos %v100
    %v102 = vrcp.pop 192.0
    %s103 = vtos %v102
    %s104 = smul.f32 %s101, %s103
    %v105 = vld [vmem:[#allocation5] sm:$0x3]
    %v106 = vld [vmem:[#allocation7] sm:$0x3]
    %v107 = vsub.f32 %v105, %v106
    %v108 = vmul.f32 %v107, %v107
    %vm109 = vcmask 254976
    %v110 = vsel %vm109, %v108, 0.0
    %111 = vadd.xlane.f32.xlu0 %v110
    %v112 = vpop.xlane.xlu0 %111
    %v113 = vrot.slane %v112, 4
    %v114 = vadd.f32 %v112, %v113
    %v115 = vrot.slane %v114, 2
    %v116 = vadd.f32 %v114, %v115
    %v117 = vrot.slane %v116, 1
    %v118 = vadd.f32 %v116, %v117
    %s119 = vtos %v118
    %v120 = vrcp.pop 64.0
    %s121 = vtos %v120
    %s122 = smul.f32 %s119, %s121
    %v123 = vld [vmem:[#allocation8] sm:$0x3]
    %v124 = vsub.f32 %v123, 1.0
    %v125 = vmul.f32 %v124, %v124
    %vm126 = vcmask 123904
    %v127 = vsel %vm126, %v125, 0.0
    %128 = vadd.xlane.f32.xlu0 %v127
    %v129 = vpop.xlane.xlu0 %128
    %v130 = vrot.slane %v129, 4
    %v131 = vadd.f32 %v129, %v130
    %v132 = vrot.slane %v131, 2
    %v133 = vadd.f32 %v131, %v132
    %v134 = vrot.slane %v133, 1
    %v135 = vadd.f32 %v133, %v134
    %s136 = vtos %v135
    %v137 = vrcp.pop 32.0
    %s138 = vtos %v137
    %s139 = smul.f32 %s136, %s138
    %v140 = vld [vmem:[%s5] sm:$0xff]
    %v141 = vld [vmem:[%s5 + $0x8] sm:$0xff]
    %v142 = vld [vmem:[#allocation10] sm:$0xff]
    %v143 = vld [vmem:[#allocation10 + $0x8] sm:$0xff]
    %v144 = vsub.f32 %v140, %v142
    %v145 = vsub.f32 %v141, %v143
    %v146 = vmul.f32 %v144, %v144
    %v147 = vmul.f32 %v145, %v145
    %vm148 = vcmask 97280
    %v149 = vsel %vm148, %v146, 0.0
    %v150 = vsel %vm148, %v147, 0.0
    %v151 = vadd.f32 %v149, %v150
    %152 = vadd.xlane.f32.xlu0 %v151
    %v153 = vpop.xlane.xlu0 %152
    %v154 = vrot.slane %v153, 4
    %v155 = vadd.f32 %v153, %v154
    %v156 = vrot.slane %v155, 2
    %v157 = vadd.f32 %v155, %v156
    %v158 = vrot.slane %v157, 1
    %v159 = vadd.f32 %v157, %v158
    %s160 = vtos %v159
    %v161 = vrcp.pop 192.0
    %s162 = vtos %v161
    %s163 = smul.f32 %s160, %s162
    %v164 = vrot.slane %v144, 1
    %v165 = vrot.slane %v145, 1
    %v166 = vlaneseq
    %v167 = vshrl.u32 %v166, 7
    %vm168 = vcmp.lt.s32.totalorder %v167, 7
    %v169 = vsel %vm168, %v164, %v165
    %v170 = vsel %vm168, %v165, %v164
    %v171 = vsub.f32 %v169, %v144
    %v172 = vsub.f32 %v170, %v145
    %v173 = vadd.s32 %v167, 8
    %vm174 = vcmp.eq.s32.totalorder %v167, 7
    %vm175 = vcmp.eq.s32.totalorder %v173, 7
    %vm176 = vcmp.eq.s32.totalorder %v167, 15
    %vm177 = vcmp.eq.s32.totalorder %v173, 15
    %vm178 = vmor %vm174, %vm176
    %vm179 = vmor %vm175, %vm177
    %v180 = vsel %vm178, 0.0, %v171
    %v181 = vsel %vm179, 0.0, %v172
    %v182 = vmul.f32 %v180, %v180
    %v183 = vmul.f32 %v181, %v181
    %v184 = vsel %vm148, %v182, 0.0
    %v185 = vsel %vm148, %v183, 0.0
    %v186 = vadd.f32 %v184, %v185
    %187 = vadd.xlane.f32.xlu0 %v186
    %v188 = vpop.xlane.xlu0 %187
    %v189 = vrot.slane %v188, 4
    %v190 = vadd.f32 %v188, %v189
    %v191 = vrot.slane %v190, 2
    %v192 = vadd.f32 %v190, %v191
    %v193 = vrot.slane %v192, 1
    %v194 = vadd.f32 %v192, %v193
    %s195 = vtos %v194
    %v196 = vrcp.pop 168.0
    %s197 = vtos %v196
    %s198 = smul.f32 %s195, %s197
    %s199 = sadd.f32 %s163, %s198
    %v200 = vlaneseq
    %v201 = vand.u32 %v200, 127
    %vm202 = vcmp.eq.s32.totalorder %v201, 0
    %v203 = vstv %s139
    %v204 = vsel %vm202, %v203, 0.0
    %vm205 = vcmp.eq.s32.totalorder %v201, 1
    %v206 = vstv %s104
    %v207 = vsel %vm205, %v206, 0.0
    %v208 = vadd.f32 %v204, %v207
    %vm209 = vcmp.eq.s32.totalorder %v201, 2
    %v210 = vstv %s122
    %v211 = vsel %vm209, %v210, 0.0
    %v212 = vadd.f32 %v208, %v211
    %vm213 = vcmp.eq.s32.totalorder %v201, 3
    %v214 = vstv %s199
    %v215 = vsel %vm213, %v214, 0.0
    %v216 = vadd.f32 %v212, %v215
    %vm217 = vcmp.eq.s32.totalorder %v201, 4
    %v218 = vsel %vm217, %v203, 0.0
    %v219 = vadd.f32 %v216, %v218
    %vm220 = vcmask 57344
    %221 = vst.msk [vmem:[#allocation11] sm:$0x1] %vm220, %v219
    // Predicated region
    $region50: #{tpu_custom_call.1} parent=1 // pred_check
      _
    $region51: #{tpu_custom_call.1} parent=1 // pred_check_branch
      %223 = sbr.rel (0) target = $region53
    $region52: #{tpu_custom_call.1} parent=1 // pred_region
      %s225 = ssub.s32 16, 16
      %226 = vsyncadd [#allocation4], %s225
      %s228 = sshll.u32 [#allocation11], 4
      %s229 = int_to_ptr.vmem [resolvable:$true] %s228
      %231 = dma.vmem_to_hbm [thread:$0]  %s229, 16, %s7, [#allocation4]
    $region53: #{tpu_custom_call.1} parent=1 // pred_fallthru
      _
    // Predicated region
    $region54: #{tpu_custom_call.1} parent=1 // pred_check
      _
    $region55: #{tpu_custom_call.1} parent=1 // pred_check_branch
      %233 = sbr.rel (0) target = $region57
    $region56: #{tpu_custom_call.1} parent=1 // pred_region
      %234 = dma.done [#allocation4], 16
    $region57: #{tpu_custom_call.1} parent=1 // pred_fallthru
      _
    %235 = vsyncpa [#allocation3], 1
    %236 = vsyncpa [#allocation6], 1
    %237 = vsyncpa [#allocation9], 1
    %238 = vsyncpa [#allocation4], 1

</llo_original>
